<compile_context>
chip_gen: v7x
topology: tpu7x:2x2x1
jax: 0.10.0
libtpu: 0.0.40
codegen_flags: <defaults>
</compile_context>

<pallas_src>
import jax
import jax.numpy as jnp
from jax.experimental import pallas as pl
from jax.experimental.pallas import tpu as pltpu


def _round_up(x, m):
    return ((x + m - 1) // m) * m


def _patch_embed_kernel(p_ref, w_ref, posb_ref, o_ref):
    """One grid step == one (batch, row-tile) pair.

    p_ref:    (TM, Kp)  bf16  patch rows for this tile (zero-padded)
    w_ref:    (Kp, Dp)  bf16  linear weight, transposed for x @ W (zero-padded)
    posb_ref: (TM, Dp)  f32   pos[1:] + bias for this row tile (zero-padded)
    o_ref:    (TM, Dp)  f32   output tile
    """
    acc = jnp.dot(p_ref[...], w_ref[...], preferred_element_type=jnp.float32)
    o_ref[...] = (acc + posb_ref[...]).astype(o_ref.dtype)


def patch_embedding_forward(x, weight, bias, token, pos,
                            patch_height, patch_width):
    """x: (B, C, H, W) f32.  weight: (dim, patch_dim), bias: (dim,)
    token: (1, 1, dim), pos: (1, num_patches + 1, dim).
    Returns (B, num_patches + 1, dim) f32."""
    B, C, H, W = x.shape
    p1, p2 = patch_height, patch_width
    h, w = H // p1, W // p2
    N = h * w
    patch_dim = C * p1 * p2
    dim = weight.shape[0]

    # --- im2col glue (XLA): 'b c (h p1) (w p2) -> b (h w) (p1 p2 c)' ---------
    patches = x.reshape(B, C, h, p1, w, p2)
    patches = jnp.transpose(patches, (0, 2, 4, 3, 5, 1)).reshape(B, N, patch_dim)

    # --- padding / tiling ----------------------------------------------------
    Kp = _round_up(patch_dim, 128)          # contraction dim, lane-aligned
    Dp = _round_up(dim, 128)                # output dim, lane-dense stores
    TM = 256 if N >= 128 else _round_up(N, 8)   # MXU-friendly row tile
    Np = _round_up(N, TM)

    patches_p = jnp.pad(patches.astype(jnp.bfloat16),
                        ((0, 0), (0, Np - N), (0, Kp - patch_dim)))
    w_p = jnp.pad(weight.T.astype(jnp.bfloat16),
                  ((0, Kp - patch_dim), (0, Dp - dim)))
    posb = pos.reshape(N + 1, dim)[1:, :] + bias.reshape(1, dim)     # fuse bias
    posb_p = jnp.pad(posb.astype(jnp.float32), ((0, Np - N), (0, Dp - dim)))

    grid = (B, Np // TM)

    # --- VMEM budget (double-buffered pipeline) + cost hint ------------------
    vmem_need = (2 * TM * Kp * 2            # patches tile (bf16) x 2 bufs
                 + 2 * Kp * Dp * 2          # weight (bf16), constant index
                 + 2 * TM * Dp * 4          # posb tile (f32)
                 + 2 * TM * Dp * 4)         # output tile (f32)
    vmem_limit = int(min(48 * 2**20, max(3 * vmem_need, 16 * 2**20)))
    cost = pl.CostEstimate(
        flops=2 * B * Np * Kp * Dp,
        transcendentals=0,
        bytes_accessed=(B * Np * Kp * 2 + Kp * Dp * 2
                        + Np * Dp * 4 + B * Np * Dp * 4),
    )

    out_p = pl.pallas_call(
        _patch_embed_kernel,
        out_shape=jax.ShapeDtypeStruct((B, Np, Dp), jnp.float32),
        grid_spec=pltpu.PrefetchScalarGridSpec(
            num_scalar_prefetch=0,
            grid=grid,
            in_specs=[
                pl.BlockSpec((pl.Squeezed(), TM, Kp), lambda b, m: (b, m, 0)),
                pl.BlockSpec((Kp, Dp), lambda b, m: (0, 0)),
                pl.BlockSpec((TM, Dp), lambda b, m: (m, 0)),
            ],
            out_specs=pl.BlockSpec((pl.Squeezed(), TM, Dp),
                                   lambda b, m: (b, m, 0)),
        ),
        compiler_params=pltpu.CompilerParams(
            dimension_semantics=("parallel", "parallel"),
            vmem_limit_bytes=vmem_limit),
        cost_estimate=cost,
    )(patches_p, w_p, posb_p)

    body = out_p[:, :N, :dim]                                # drop padding

    # cls row: token + pos[0]  (1-row concat kept as a tiny XLA op, so the
    # kernel output stays N/128-aligned with no masked stores).
    cls_row = (token.reshape(1, 1, dim)
               + pos.reshape(1, N + 1, dim)[:, 0:1, :]).astype(body.dtype)
    cls_row = jnp.broadcast_to(cls_row, (B, 1, dim))
    return jnp.concatenate([cls_row, body], axis=1)


def _reference(x, weight, bias, token, pos, p1, p2):
    """Pure-f32 JAX reference matching the PyTorch module forward (eval mode)."""
    B, C, H, W = x.shape
    h, w = H // p1, W // p2
    patches = x.reshape(B, C, h, p1, w, p2)
    patches = jnp.transpose(patches, (0, 2, 4, 3, 5, 1)).reshape(B, h * w, -1)
    lin = patches @ weight.T + bias
    tok = jnp.broadcast_to(token.reshape(1, 1, -1), (B, 1, weight.shape[0]))
    out = jnp.concatenate([tok, lin], axis=1)
    out = out + pos.reshape(1, h * w + 1, -1)
    return out


if __name__ == "__main__":
    # Small shapes consistent with the module's forward:
    #   batch=2, channels=4, image 16x16, patch 8x8, dim=32
    B, C, H, W = 2, 4, 16, 16
    P1, P2 = 8, 8
    DIM = 32
    N = (H // P1) * (W // P2)
    patch_dim = C * P1 * P2

    key = jax.random.PRNGKey(0)
    kx, kw, kb, kt, kp = jax.random.split(key, 5)

    x = jax.random.normal(kx, (B, C, H, W), dtype=jnp.float32)
    # nn.Linear(patch_dim, dim): weight (dim, patch_dim), bias (dim,)
    limit = 1.0 / (patch_dim ** 0.5)
    weight = jax.random.uniform(kw, (DIM, patch_dim), jnp.float32, -limit, limit)
    bias = jax.random.uniform(kb, (DIM,), jnp.float32, -limit, limit)
    # nn.Parameter(torch.randn(...))
    token = jax.random.normal(kt, (1, 1, DIM), dtype=jnp.float32)
    pos = jax.random.normal(kp, (1, N + 1, DIM), dtype=jnp.float32)

    out = patch_embedding_forward(x, weight, bias, token, pos, P1, P2)
    out = jax.block_until_ready(out)

    ref = _reference(x, weight, bias, token, pos, P1, P2)
    assert out.shape == (B, N + 1, DIM)
    # bf16 MXU inputs -> loosened tolerance vs the pure-f32 reference.
    assert jnp.allclose(out, ref, atol=3e-2, rtol=3e-2), \
        float(jnp.max(jnp.abs(out - ref)))
    print("KERNEL_OK")
</pallas_src>

<mosaic_0001>
module attributes {stable_mosaic.version = 11 : i64} {
  func.func @_patch_embed_kernel(%arg0: i32, %arg1: i32, %arg2: memref<1x8x256xbf16, #tpu.memory_space<vmem>>, %arg3: memref<256x128xbf16, #tpu.memory_space<vmem>>, %arg4: memref<8x128xf32, #tpu.memory_space<vmem>>, %arg5: memref<1x8x128xf32, #tpu.memory_space<vmem>>) attributes {dimension_semantics = [#tpu.dimension_semantics<parallel>, #tpu.dimension_semantics<parallel>], iteration_bounds = array<i64: 2, 1>, scalar_prefetch = 0 : i64, scratch_operands = 0 : i64, tpu.core_type = #tpu.core_type<tc>, window_params = [{transform_indices = @transform_0, window_bounds = array<i64: 1, 8, 256>}, {pipeline_mode = #tpu.pipeline_mode<synchronous>, transform_indices = @transform_1, window_bounds = array<i64: 256, 128>}, {transform_indices = @transform_2, window_bounds = array<i64: 8, 128>}, {transform_indices = @transform_3, window_bounds = array<i64: 1, 8, 128>}]} {
    %c0 = arith.constant 0 : index
    %c0_0 = arith.constant 0 : index
    %c0_1 = arith.constant 0 : index
    %0 = vector.load %arg2[%c0, %c0_0, %c0_1] : memref<1x8x256xbf16, #tpu.memory_space<vmem>>, vector<1x8x256xbf16>
    %1 = vector.shape_cast %0 : vector<1x8x256xbf16> to vector<8x256xbf16>
    %c0_2 = arith.constant 0 : index
    %c0_3 = arith.constant 0 : index
    %2 = vector.load %arg3[%c0_2, %c0_3] : memref<256x128xbf16, #tpu.memory_space<vmem>>, vector<256x128xbf16>
    %cst = arith.constant dense<0.000000e+00> : vector<8x128xf32>
    %3 = tpu.matmul %1, %2, %cst {dimension_numbers = #tpu.dot_dimension_numbers<[1], [0], [0], [1], [0, 0, 1, 1], [], []>} : vector<8x256xbf16>, vector<256x128xbf16>, vector<8x128xf32> -> vector<8x128xf32>
    %c0_4 = arith.constant 0 : index
    %c0_5 = arith.constant 0 : index
    %4 = vector.load %arg4[%c0_4, %c0_5] : memref<8x128xf32, #tpu.memory_space<vmem>>, vector<8x128xf32>
    %5 = arith.addf %3, %4 : vector<8x128xf32>
    %c0_6 = arith.constant 0 : index
    %c0_7 = arith.constant 0 : index
    %c0_8 = arith.constant 0 : index
    %6 = vector.load %arg5[%c0_6, %c0_7, %c0_8] : memref<1x8x128xf32, #tpu.memory_space<vmem>>, vector<1x8x128xf32>
    %7 = vector.shape_cast %6 : vector<1x8x128xf32> to vector<8x128xf32>
    %8 = vector.shape_cast %5 : vector<8x128xf32> to vector<1x8x128xf32>
    tpu.vector_store %arg5[%c0_6, %c0_7, %c0_8], %8 {strides = array<i32>} : memref<1x8x128xf32, #tpu.memory_space<vmem>>, vector<1x8x128xf32>,
    return
  }
  func.func @transform_0(%arg0: i32, %arg1: i32) -> (i32, i32, i32) {
    %c0_i32 = arith.constant 0 : i32
    %c0_i32_0 = arith.constant 0 : i32
    return %arg0, %arg1, %c0_i32 : i32, i32, i32
  }
  func.func @transform_1(%arg0: i32, %arg1: i32) -> (i32, i32) {
    %c0_i32 = arith.constant 0 : i32
    %c0_i32_0 = arith.constant 0 : i32
    %c0_i32_1 = arith.constant 0 : i32
    return %c0_i32, %c0_i32_0 : i32, i32
  }
  func.func @transform_2(%arg0: i32, %arg1: i32) -> (i32, i32) {
    %c0_i32 = arith.constant 0 : i32
    %c0_i32_0 = arith.constant 0 : i32
    return %arg1, %c0_i32 : i32, i32
  }
  func.func @transform_3(%arg0: i32, %arg1: i32) -> (i32, i32, i32) {
    %c0_i32 = arith.constant 0 : i32
    %c0_i32_0 = arith.constant 0 : i32
    return %arg0, %arg1, %c0_i32 : i32, i32, i32
  }
}

</mosaic_0001>

<llo_original>
// kernel: tpu_custom_call.1
$region0: #{tpu_custom_call.1}
  #allocation0 [shape = 'u32[]', space=smem, size = 0x4, offset = 0x4, fixed_abs, tag = 'smem constant byte address 0x4 - core index']
  #allocation1 [shape = 'u32[144,128]{1,0:T(1,128)}', space=vmem, size = 0x12000, scoped, tag = 'internal scratch']
  %s0 = inlined_call_operand.hbm [shape: bf16[2,8,256], index: 0, kind: input, shape index: {}]
  %s1 = inlined_call_operand.hbm [shape: bf16[256,128], index: 1, kind: input, shape index: {}]
  %s2 = inlined_call_operand.hbm [shape: f32[8,128], index: 2, kind: input, shape index: {}]
  %s3 = inlined_call_operand.hbm [shape: f32[2,8,128], index: 3, kind: output, shape index: {}]
  %s4 = sld [smem:[#allocation0]]
  $region57: #{tpu_custom_call.1} parent=0
    _
  %s6 = ssub.s32 1, %s4
  %s7 = scalar_select 0, %s6, %s4
  $region1: #{tpu_custom_call.1} parent=0
    #allocation2 [shape = 'u8[8192]{0}', space=vmem, size = 0x2000, scoped, tag = 'input window, operand 0']
    #allocation3 [shape = 's32[2]{0}', space=sflag, size = 0x8, scoped, tag = 'scoped memory for tpu_custom_call.1']
    #allocation4 [shape = 's32[2]{0}', space=sflag, size = 0x8, scoped, tag = 'scoped memory for tpu_custom_call.1']
    #allocation5 [shape = 'u8[65536]{0}', space=vmem, size = 0x10000, scoped, tag = 'input window, operand 1, single buffered']
    #allocation6 [shape = 's32[1]{0}', space=sflag, size = 0x4, scoped, tag = 'scoped memory for tpu_custom_call.1']
    #allocation7 [shape = 'u8[4096]{0}', space=vmem, size = 0x1000, scoped, tag = 'input window, operand 2, single buffered']
    #allocation8 [shape = 'u8[8192]{0}', space=vmem, size = 0x2000, scoped, tag = 'output window, operand 0']
    %8 = vsyncpa [#allocation3], 0
    %s9 = scalar_lea.sflag [#allocation3], 1
    %10 = vsyncpa %s9, 0
    %11 = vsyncpa [#allocation6], 0
    %12 = vsyncpa [#allocation4], 0
    %s13 = scalar_lea.sflag [#allocation4], 1
    %14 = vsyncpa %s13, 0
    loop: start=0, step=1, limit=4
    $region2: #{tpu_custom_call.1} parent=1 // loop_pre_header
      _
    $region3: #{tpu_custom_call.1} parent=1 // loop_header
      %s16 = sphi 0, %s20
      %p17 = scmp.ge.s32.totalorder %s16, 4
      %s23 = sphi 0, %s35
      %s24 = sphi 0, %s31
      %s25 = sphi 0, %s23
      %s26 = sphi 0, %s24
      %s27 = sphi 0, %s25
      %s28 = sphi 0, %s26
      %s40 = sphi 0, %s42
      %s43 = sphi 0, %s40
      %s44 = sphi 0, %s43
      %s60 = sphi 0, %s44
      %s64 = sphi 0, %s64
      %s66 = sphi 0, %s64
      %s67 = sphi 0, %s66
      %s81 = sphi 0, %s67
      %s87 = sphi 0, %s89
      %s90 = sphi 0, %s87
      %s91 = sphi 0, %s90
      %s107 = sphi 0, %s91
      %s115 = sphi 0, %s117
      %s118 = sphi 0, %s115
      %s119 = sphi 0, %s118
      %s135 = sphi 0, %s119
    $region4: #{tpu_custom_call.1} parent=1 // loop_header_branch
      %19 = sbr.rel (%p17) target = $region8
    $region5: #{tpu_custom_call.1} parent=1 // loop_body
      %s21 = ssub.s32 %s16, 1
      %s22 = ssub.s32 %s16, 2
      %s29 = sadd.s32 1, %s24
      %p30 = scmp.ge.s32.totalorder %s29, 1
      %s31 = scalar_select %p30, 0, %s29
      %s32 = sadd.s32 1, %s23
      %s33 = scalar_select %p30, %s32, %s23
      %p34 = scmp.ge.s32.totalorder %s33, 2
      %s35 = scalar_select %p34, 0, %s33
      %s36 = ssub.s32 %s23, %s35
      %s37 = ssub.s32 %s24, %s31
      %s38 = sor.u32 %s36, %s37
      %p39 = scmp.eq.s32.totalorder %s38, 0
      %s41 = sadd.s32 %s40, 1
      %s42 = scalar_select %p39, %s40, %s41
      %p45 = pneg %p39
      %p46 = scmp.eq.s32.totalorder %s16, 1
      %p47 = por %p45, %p46
      %p48 = scmp.ne.s32.totalorder %s40, %s43
      %p49 = scmp.eq.s32.totalorder %s16, 0
      %p50 = por %p48, %p49
      %p51 = scmp.ne.s32.totalorder %s40, %s43
      %p52 = scmp.eq.s32.totalorder %s21, 1
      %p53 = por %p51, %p52
      %p54 = scmp.ne.s32.totalorder %s43, %s44
      %p55 = scmp.eq.s32.totalorder %s21, 0
      %p56 = por %p54, %p55
      %p57 = scmp.ne.s32.totalorder %s43, %s44
      %p58 = scmp.eq.s32.totalorder %s22, 1
      %p59 = por %p57, %p58
      %p61 = scmp.ne.s32.totalorder %s44, %s60
      %p62 = scmp.eq.s32.totalorder %s22, 0
      %p63 = por %p61, %p62
      %s65 = sadd.s32 %s64, 1
      %p68 = scmp.eq.s32.totalorder %s16, 1
      %p69 = scmp.ne.s32.totalorder %s64, %s66
      %p70 = scmp.eq.s32.totalorder %s16, 0
      %p71 = por %p69, %p70
      %p72 = scmp.ne.s32.totalorder %s64, %s66
      %p73 = scmp.eq.s32.totalorder %s21, 1
      %p74 = por %p72, %p73
      %p75 = scmp.ne.s32.totalorder %s66, %s67
      %p76 = scmp.eq.s32.totalorder %s21, 0
      %p77 = por %p75, %p76
      %p78 = scmp.ne.s32.totalorder %s66, %s67
      %p79 = scmp.eq.s32.totalorder %s22, 1
      %p80 = por %p78, %p79
      %p82 = scmp.ne.s32.totalorder %s67, %s81
      %p83 = scmp.eq.s32.totalorder %s22, 0
      %p84 = por %p82, %p83
      %s85 = ssub.s32 %s24, %s31
      %p86 = scmp.eq.s32.totalorder %s85, 0
      %s88 = sadd.s32 %s87, 1
      %s89 = scalar_select %p86, %s87, %s88
      %p92 = pneg %p86
      %p93 = scmp.eq.s32.totalorder %s16, 1
      %p94 = por %p92, %p93
      %p95 = scmp.ne.s32.totalorder %s87, %s90
      %p96 = scmp.eq.s32.totalorder %s16, 0
      %p97 = por %p95, %p96
      %p98 = scmp.ne.s32.totalorder %s87, %s90
      %p99 = scmp.eq.s32.totalorder %s21, 1
      %p100 = por %p98, %p99
      %p101 = scmp.ne.s32.totalorder %s90, %s91
      %p102 = scmp.eq.s32.totalorder %s21, 0
      %p103 = por %p101, %p102
      %p104 = scmp.ne.s32.totalorder %s90, %s91
      %p105 = scmp.eq.s32.totalorder %s22, 1
      %p106 = por %p104, %p105
      %p108 = scmp.ne.s32.totalorder %s91, %s107
      %p109 = scmp.eq.s32.totalorder %s22, 0
      %p110 = por %p108, %p109
      %s111 = ssub.s32 %s23, %s35
      %s112 = ssub.s32 %s24, %s31
      %s113 = sor.u32 %s111, %s112
      %p114 = scmp.eq.s32.totalorder %s113, 0
      %s116 = sadd.s32 %s115, 1
      %s117 = scalar_select %p114, %s115, %s116
      %p120 = pneg %p114
      %p121 = scmp.eq.s32.totalorder %s16, 1
      %p122 = por %p120, %p121
      %p123 = scmp.ne.s32.totalorder %s115, %s118
      %p124 = scmp.eq.s32.totalorder %s16, 0
      %p125 = por %p123, %p124
      %p126 = scmp.ne.s32.totalorder %s115, %s118
      %p127 = scmp.eq.s32.totalorder %s21, 1
      %p128 = por %p126, %p127
      %p129 = scmp.ne.s32.totalorder %s118, %s119
      %p130 = scmp.eq.s32.totalorder %s21, 0
      %p131 = por %p129, %p130
      %p132 = scmp.ne.s32.totalorder %s118, %s119
      %p133 = scmp.eq.s32.totalorder %s22, 1
      %p134 = por %p132, %p133
      %p136 = scmp.ne.s32.totalorder %s119, %s135
      %p137 = scmp.eq.s32.totalorder %s22, 0
      %p138 = por %p136, %p137
      %p139 = scmp.le.s32.totalorder 1, %s16
      %p140 = scmp.lt.s32.totalorder %s16, 3
      %p141 = pnand %p139, %p140
      %p142 = pneg %p141
      // Predicated region
      $region9: #{tpu_custom_call.1} parent=5 // pred_check
        _
      $region10: #{tpu_custom_call.1} parent=5 // pred_check_branch
        %144 = sbr.rel (%p141) target = $region12
      $region11: #{tpu_custom_call.1} parent=5 // pred_region
        %s145 = ssub.s32 %s16, 1
        // Predicated region
        $region13: #{tpu_custom_call.1} parent=11 // pred_check
          %p146 = pneg %p77
        $region14: #{tpu_custom_call.1} parent=11 // pred_check_branch
          %148 = sbr.rel (%p146) target = $region16
        $region15: #{tpu_custom_call.1} parent=11 // pred_region
          %s150 = ssub.s32 2048, 2048
          %151 = vsyncadd [#allocation6], %s150
          %s152 = sshll.u32 [#allocation5], 4
          %s153 = int_to_ptr.vmem [resolvable:$true] %s152
          %158 = dma.hbm_to_vmem [thread:$0]  %s1, 2048, %s153, [#allocation6], 64, 64, 4
        $region16: #{tpu_custom_call.1} parent=11 // pred_fallthru
          _
        // Predicated region
        $region17: #{tpu_custom_call.1} parent=11 // pred_check
          %p159 = pneg %p103
        $region18: #{tpu_custom_call.1} parent=11 // pred_check_branch
          %161 = sbr.rel (%p159) target = $region20
        $region19: #{tpu_custom_call.1} parent=11 // pred_region
          %s163 = ssub.s32 128, 128
          %164 = vsyncadd [#allocation6], %s163
          %s165 = smul.addr %s26, 128
          %s166 = scalar_lea.hbm %s2, %s165
          %s168 = sshll.u32 [#allocation7], 4
          %s169 = int_to_ptr.vmem [resolvable:$true] %s168
          %171 = dma.hbm_to_vmem [thread:$0]  %s166, 128, %s169, [#allocation6]
        $region20: #{tpu_custom_call.1} parent=11 // pred_fallthru
          _
      $region12: #{tpu_custom_call.1} parent=5 // pred_fallthru
        _
      %p172 = scmp.lt.s32.totalorder %s16, 2
      // Predicated region
      $region21: #{tpu_custom_call.1} parent=5 // pred_check
        %p173 = pneg %p172
      $region22: #{tpu_custom_call.1} parent=5 // pred_check_branch
        %175 = sbr.rel (%p173) target = $region24
      $region23: #{tpu_custom_call.1} parent=5 // pred_region
        // Predicated region
        $region25: #{tpu_custom_call.1} parent=23 // pred_check
          %p176 = pneg %p50
        $region26: #{tpu_custom_call.1} parent=23 // pred_check_branch
          %178 = sbr.rel (%p176) target = $region28
        $region27: #{tpu_custom_call.1} parent=23 // pred_region
          %s179 = sand.u32 %s40, 1
          %s180 = scalar_lea.sflag [#allocation3], %s179
          %s181 = sand.u32 %s40, 1
          %s182 = smul.addr %s181, 8
          %s183 = scalar_lea.vmem [#allocation2], %s182
          %s185 = ssub.s32 128, 128
          %186 = vsyncadd %s180, %s185
          %s187 = smul.addr %s24, 2
          %s188 = smul.addr %s23, 2
          %s189 = sadd.s32 %s187, %s188
          %s190 = smul.addr %s189, 64
          %s191 = scalar_lea.hbm %s0, %s190
          %s193 = sshll.u32 %s183, 4
          %s194 = int_to_ptr.vmem [resolvable:$true] %s193
          %196 = dma.hbm_to_vmem [thread:$0]  %s191, 128, %s194, %s180
        $region28: #{tpu_custom_call.1} parent=23 // pred_fallthru
          _
      $region24: #{tpu_custom_call.1} parent=5 // pred_fallthru
        _
      %p197 = scmp.le.s32.totalorder 1, %s16
      %p198 = scmp.lt.s32.totalorder %s16, 3
      %p199 = pnand %p197, %p198
      %p200 = pneg %p199
      // Predicated region
      $region29: #{tpu_custom_call.1} parent=5 // pred_check
        _
      $region30: #{tpu_custom_call.1} parent=5 // pred_check_branch
        %202 = sbr.rel (%p199) target = $region32
      $region31: #{tpu_custom_call.1} parent=5 // pred_region
        %s203 = ssub.s32 %s16, 1
        %s204 = sand.u32 %s43, 1
        %s205 = scalar_lea.sflag [#allocation3], %s204
        %s206 = sand.u32 %s43, 1
        %s207 = smul.addr %s206, 8
        %s208 = scalar_lea.vmem [#allocation2], %s207
        // Predicated region
        $region33: #{tpu_custom_call.1} parent=31 // pred_check
          %p209 = pneg %p56
        $region34: #{tpu_custom_call.1} parent=31 // pred_check_branch
          %211 = sbr.rel (%p209) target = $region36
        $region35: #{tpu_custom_call.1} parent=31 // pred_region
          %212 = dma.done %s205, 128
        $region36: #{tpu_custom_call.1} parent=31 // pred_fallthru
          _
        // Predicated region
        $region37: #{tpu_custom_call.1} parent=31 // pred_check
          %p213 = pneg %p77
        $region38: #{tpu_custom_call.1} parent=31 // pred_check_branch
          %215 = sbr.rel (%p213) target = $region40
        $region39: #{tpu_custom_call.1} parent=31 // pred_region
          %216 = dma.done [#allocation6], 2048
        $region40: #{tpu_custom_call.1} parent=31 // pred_fallthru
          _
        // Predicated region
        $region41: #{tpu_custom_call.1} parent=31 // pred_check
          %p217 = pneg %p103
        $region42: #{tpu_custom_call.1} parent=31 // pred_check_branch
          %219 = sbr.rel (%p217) target = $region44
        $region43: #{tpu_custom_call.1} parent=31 // pred_region
          %220 = dma.done [#allocation6], 128
        $region44: #{tpu_custom_call.1} parent=31 // pred_fallthru
          _
        %s221 = sand.u32 %s43, 1
        %s222 = scalar_lea.sflag [#allocation3], %s221
        %s223 = sand.u32 %s43, 1
        %s224 = smul.addr %s223, 8
        %s225 = scalar_lea.vmem [#allocation2], %s224
        %p226 = pneg %p56
        %p227 = pneg %p53
        %p228 = pneg %p77
        %p229 = pneg %p74
        %p230 = pneg %p103
        %p231 = pneg %p100
        %p232 = pneg %p131
        %p233 = pneg %p128
        %s234 = sand.u32 %s118, 1
        %s235 = scalar_lea.sflag [#allocation4], %s234
        %s236 = sand.u32 %s118, 1
        %s237 = smul.addr %s236, 8
        %s238 = scalar_lea.vmem [#allocation8], %s237
        %v240 = vld [vmem:[%s208] sm:$0xff]
        %v241 = vld [vmem:[#allocation5] sm:$0xf]
        %v242 = vld [vmem:[#allocation5 + $0x4] sm:$0xf]
        %v243 = vld [vmem:[#allocation5 + $0x8] sm:$0xf]
        %v244 = vld [vmem:[#allocation5 + $0xc] sm:$0xf]
        %v245 = vld [vmem:[#allocation5 + $0x10] sm:$0xf]
        %v246 = vld [vmem:[#allocation5 + $0x14] sm:$0xf]
        %v247 = vld [vmem:[#allocation5 + $0x18] sm:$0xf]
        %v248 = vld [vmem:[#allocation5 + $0x1c] sm:$0xf]
        %v249 = vld [vmem:[#allocation5 + $0x20] sm:$0xf]
        %v250 = vld [vmem:[#allocation5 + $0x24] sm:$0xf]
        %v251 = vld [vmem:[#allocation5 + $0x28] sm:$0xf]
        %v252 = vld [vmem:[#allocation5 + $0x2c] sm:$0xf]
        %v253 = vld [vmem:[#allocation5 + $0x30] sm:$0xf]
        %v254 = vld [vmem:[#allocation5 + $0x34] sm:$0xf]
        %v255 = vld [vmem:[#allocation5 + $0x38] sm:$0xf]
        %v256 = vld [vmem:[#allocation5 + $0x3c] sm:$0xf]
        %v257 = vld [vmem:[#allocation5 + $0x40] sm:$0xf]
        %v258 = vld [vmem:[#allocation5 + $0x44] sm:$0xf]
        %v259 = vld [vmem:[#allocation5 + $0x48] sm:$0xf]
        %v260 = vld [vmem:[#allocation5 + $0x4c] sm:$0xf]
        %v261 = vld [vmem:[#allocation5 + $0x50] sm:$0xf]
        %v262 = vld [vmem:[#allocation5 + $0x54] sm:$0xf]
        %v263 = vld [vmem:[#allocation5 + $0x58] sm:$0xf]
        %v264 = vld [vmem:[#allocation5 + $0x5c] sm:$0xf]
        %v265 = vld [vmem:[#allocation5 + $0x60] sm:$0xf]
        %v266 = vld [vmem:[#allocation5 + $0x64] sm:$0xf]
        %v267 = vld [vmem:[#allocation5 + $0x68] sm:$0xf]
        %v268 = vld [vmem:[#allocation5 + $0x6c] sm:$0xf]
        %v269 = vld [vmem:[#allocation5 + $0x70] sm:$0xf]
        %v270 = vld [vmem:[#allocation5 + $0x74] sm:$0xf]
        %v271 = vld [vmem:[#allocation5 + $0x78] sm:$0xf]
        %v272 = vld [vmem:[#allocation5 + $0x7c] sm:$0xf]
        %v273 = vld [vmem:[#allocation7] sm:$0xff]
        %v275 = vunpack.c.l.b16 %v240
        %v276 = vunpack.c.h.b16 %v240
        %v277 = vpack.c.b16 %v275, %v275
        %v278 = vpack.c.b16 %v276, %v276
        %v313 = vunpack.c.l.b16 %v241
        %v314 = vunpack.c.l.b16 %v242
        %v315 = vunpack.c.l.b16 %v243
        %v316 = vunpack.c.l.b16 %v244
        %v317 = vunpack.c.l.b16 %v245
        %v318 = vunpack.c.l.b16 %v246
        %v319 = vunpack.c.l.b16 %v247
        %v320 = vunpack.c.l.b16 %v248
        %v321 = vunpack.c.l.b16 %v249
        %v322 = vunpack.c.l.b16 %v250
        %v323 = vunpack.c.l.b16 %v251
        %v324 = vunpack.c.l.b16 %v252
        %v325 = vunpack.c.l.b16 %v253
        %v326 = vunpack.c.l.b16 %v254
        %v327 = vunpack.c.l.b16 %v255
        %v328 = vunpack.c.l.b16 %v256
        %v329 = vunpack.c.l.b16 %v257
        %v330 = vunpack.c.l.b16 %v258
        %v331 = vunpack.c.l.b16 %v259
        %v332 = vunpack.c.l.b16 %v260
        %v333 = vunpack.c.l.b16 %v261
        %v334 = vunpack.c.l.b16 %v262
        %v335 = vunpack.c.l.b16 %v263
        %v336 = vunpack.c.l.b16 %v264
        %v337 = vunpack.c.l.b16 %v265
        %v338 = vunpack.c.l.b16 %v266
        %v339 = vunpack.c.l.b16 %v267
        %v340 = vunpack.c.l.b16 %v268
        %v341 = vunpack.c.l.b16 %v269
        %v342 = vunpack.c.l.b16 %v270
        %v343 = vunpack.c.l.b16 %v271
        %v344 = vunpack.c.l.b16 %v272
        %v345 = vpack.c.b16 %v314, %v313
        %v346 = vpack.c.b16 %v316, %v315
        %v347 = vpack.c.b16 %v318, %v317
        %v348 = vpack.c.b16 %v320, %v319
        %v349 = vpack.c.b16 %v322, %v321
        %v350 = vpack.c.b16 %v324, %v323
        %v351 = vpack.c.b16 %v326, %v325
        %v352 = vpack.c.b16 %v328, %v327
        %v353 = vpack.c.b16 %v330, %v329
        %v354 = vpack.c.b16 %v332, %v331
        %v355 = vpack.c.b16 %v334, %v333
        %v356 = vpack.c.b16 %v336, %v335
        %v357 = vpack.c.b16 %v338, %v337
        %v358 = vpack.c.b16 %v340, %v339
        %v359 = vpack.c.b16 %v342, %v341
        %v360 = vpack.c.b16 %v344, %v343
        %377 = vmatprep.subr.bf16.mxu0 0
        %378 = vmatpush1.bf16.msra.mxu0 %v345
        %379 = vmatprep.subr.bf16.mxu0 0
        %380 = vmatpush1.bf16.msra.mxu0 %v346
        %381 = vmatprep.subr.bf16.mxu0 0
        %382 = vmatpush1.bf16.msra.mxu0 %v347
        %383 = vmatprep.subr.bf16.mxu0 0
        %384 = vmatpush1.bf16.msra.mxu0 %v348
        %385 = vmatprep.subr.bf16.mxu0 0
        %386 = vmatpush1.bf16.msra.mxu0 %v349
        %387 = vmatprep.subr.bf16.mxu0 0
        %388 = vmatpush1.bf16.msra.mxu0 %v350
        %389 = vmatprep.subr.bf16.mxu0 0
        %390 = vmatpush1.bf16.msra.mxu0 %v351
        %391 = vmatprep.subr.bf16.mxu0 0
        %392 = vmatpush1.bf16.msra.mxu0 %v352
        %393 = vmatprep.subr.bf16.mxu0 0
        %394 = vmatpush1.bf16.msra.mxu0 %v353
        %395 = vmatprep.subr.bf16.mxu0 0
        %396 = vmatpush1.bf16.msra.mxu0 %v354
        %397 = vmatprep.subr.bf16.mxu0 0
        %398 = vmatpush1.bf16.msra.mxu0 %v355
        %399 = vmatprep.subr.bf16.mxu0 0
        %400 = vmatpush1.bf16.msra.mxu0 %v356
        %401 = vmatprep.subr.bf16.mxu0 0
        %402 = vmatpush1.bf16.msra.mxu0 %v357
        %403 = vmatprep.subr.bf16.mxu0 0
        %404 = vmatpush1.bf16.msra.mxu0 %v358
        %405 = vmatprep.subr.bf16.mxu0 0
        %406 = vmatpush1.bf16.msra.mxu0 %v359
        %407 = vmatprep.subr.bf16.mxu0 0
        %408 = vmatpush1.bf16.msra.mxu0 %v360
        %409 = vmatprep.mubr.bf16.mxu0 %v278
        %410 = vmatmul.mubr.bf16.gmra.mrb[0].mxu0 %v277
        %v411 = vpop.f32.mrb[0].mxu0
        %v412 = vadd.f32 %v273, %v411
        %v413 = vpop.f32.mrb[0].mxu0
        %v414 = vpop.f32.mrb[0].mxu0
        %v415 = vpop.f32.mrb[0].mxu0
        %416 = vdwg.mxu0
        %417 = vst [vmem:[%s238] sm:$0xff] %v412
        %s418 = sand.u32 %s118, 1
        %s419 = scalar_lea.sflag [#allocation4], %s418
        %s420 = sand.u32 %s118, 1
        %s421 = smul.addr %s420, 8
        %s422 = scalar_lea.vmem [#allocation8], %s421
        // Predicated region
        $region45: #{tpu_custom_call.1} parent=31 // pred_check
          %p423 = pneg %p128
        $region46: #{tpu_custom_call.1} parent=31 // pred_check_branch
          %425 = sbr.rel (%p423) target = $region48
        $region47: #{tpu_custom_call.1} parent=31 // pred_region
          %s427 = ssub.s32 128, 128
          %428 = vsyncadd %s419, %s427
          %s429 = sadd.s32 %s26, %s25
          %s430 = smul.addr %s429, 128
          %s431 = scalar_lea.hbm %s3, %s430
          %s433 = sshll.u32 %s422, 4
          %s434 = int_to_ptr.vmem [resolvable:$true] %s433
          %436 = dma.vmem_to_hbm [thread:$0]  %s434, 128, %s431, %s419
        $region48: #{tpu_custom_call.1} parent=31 // pred_fallthru
          _
      $region32: #{tpu_custom_call.1} parent=5 // pred_fallthru
        _
      %p437 = scmp.le.s32.totalorder 2, %s16
      // Predicated region
      $region49: #{tpu_custom_call.1} parent=5 // pred_check
        %p438 = pneg %p437
      $region50: #{tpu_custom_call.1} parent=5 // pred_check_branch
        %440 = sbr.rel (%p438) target = $region52
      $region51: #{tpu_custom_call.1} parent=5 // pred_region
        %s441 = ssub.s32 %s16, 2
        // Predicated region
        $region53: #{tpu_custom_call.1} parent=51 // pred_check
          %p442 = pneg %p134
        $region54: #{tpu_custom_call.1} parent=51 // pred_check_branch
          %444 = sbr.rel (%p442) target = $region56
        $region55: #{tpu_custom_call.1} parent=51 // pred_region
          %s445 = sand.u32 %s119, 1
          %s446 = scalar_lea.sflag [#allocation4], %s445
          %s447 = sand.u32 %s119, 1
          %s448 = smul.addr %s447, 8
          %s449 = scalar_lea.vmem [#allocation8], %s448
          %450 = dma.done %s446, 128
        $region56: #{tpu_custom_call.1} parent=51 // pred_fallthru
          _
      $region52: #{tpu_custom_call.1} parent=5 // pred_fallthru
        _
    $region6: #{tpu_custom_call.1} parent=1 // loop_footer
      %s20 = sadd.s32 1, %s16
    $region7: #{tpu_custom_call.1} parent=1 // loop_footer_branch
      %15 = sbr.rel target = $region3
    $region8: #{tpu_custom_call.1} parent=1 // loop_exit
      _
    %451 = vsyncpa [#allocation3], 1
    %s452 = scalar_lea.sflag [#allocation3], 1
    %453 = vsyncpa %s452, 1
    %454 = vsyncpa [#allocation6], 1
    %455 = vsyncpa [#allocation4], 1
    %s456 = scalar_lea.sflag [#allocation4], 1
    %457 = vsyncpa %s456, 1

</llo_original>
